<compile_context>
chip_gen: v6e
topology: v6e:2x2x1
jax: 0.10.0
libtpu: 0.0.40
codegen_flags: <defaults>
</compile_context>

<pallas_src>
import math

import jax
import jax.numpy as jnp
from jax.experimental import pallas as pl
from jax.experimental.pallas import tpu as pltpu

_GELU_C = math.sqrt(2.0 / math.pi)


def _gated_gelu_kernel(x_ref, g_ref, o_ref):
    # x_ref / g_ref / o_ref are all (row_tile, feat_tile) VMEM tiles.
    x = x_ref[...].astype(jnp.float32)
    g = g_ref[...].astype(jnp.float32)
    # NewGELU (tanh approximation), exactly as in the PyTorch module.
    act = 0.5 * g * (1.0 + jnp.tanh(_GELU_C * (g + 0.044715 * g * g * g)))
    o_ref[...] = (x * act).astype(o_ref.dtype)


def vampnet_gated_gelu(x, *, vmem_tile_budget_bytes=24 * 1024 * 1024):
    """x: [..., D] with D even. Returns [..., D//2] = x_half * NewGELU(gate_half)."""
    orig_shape = x.shape
    d = orig_shape[-1]
    assert d % 2 == 0, "last dim must be even for chunk(2, dim=-1)"
    h = d // 2

    rows = 1
    for s in orig_shape[:-1]:
        rows *= s
    x2d = x.reshape(rows, d)
    itemsize = jnp.dtype(x.dtype).itemsize

    # ---- feature-axis tile -------------------------------------------------
    # Prefer a lane-aligned tile (multiple of 128 lanes) that divides h; then we
    # can DMA both halves straight out of the original array.
    tf = 0
    for cand in (512, 384, 256, 128):
        if h % cand == 0:
            tf = cand
            break

    if tf:
        # Split path: same array twice, gate blocks offset by h // tf columns.
        gate_off = h // tf
        args = (x2d, x2d)
        in_specs = [
            pl.BlockSpec((None, tf), lambda i, j: (i, j)),      # placeholder, fixed below
            pl.BlockSpec((None, tf), lambda i, j: (i, j + gate_off)),
        ]
    else:
        # Fallback path (h not a multiple of 128, e.g. tiny feature dims):
        # pre-slice in XLA so each kernel input block spans the full array width.
        tf = h
        args = (x2d[:, :h], x2d[:, h:])
        in_specs = [
            pl.BlockSpec((None, tf), lambda i, j: (i, j)),
            pl.BlockSpec((None, tf), lambda i, j: (i, j)),
        ]

    # ---- row-axis tile: size to the VMEM budget ----------------------------
    # Live footprint per grid step ~ (2 inputs + 1 output) double-buffered = 6 tiles.
    tr = max(1, vmem_tile_budget_bytes // (6 * tf * itemsize))
    tr = min(tr, 2048)  # keep the grid long enough to pipeline / shard across TCs
    sub = 8 if itemsize >= 4 else (16 if itemsize == 2 else 32)
    if tr >= rows:
        tr = rows                       # block == full dim is always legal
    else:
        tr = max(sub, (tr // sub) * sub)  # dense sublane packing

    # Re-materialize in_specs with the final row tile (lambdas stay the same).
    in_specs = [pl.BlockSpec((tr, tf), spec.index_map) for spec in in_specs]
    out_spec = pl.BlockSpec((tr, tf), lambda i, j: (i, j))

    grid = (pl.cdiv(rows, tr), h // tf)

    cost = pl.CostEstimate(
        flops=9 * rows * h,                      # ~9 VPU ops per output element
        transcendentals=rows * h,                # one tanh per gate element
        bytes_accessed=3 * rows * h * itemsize,  # read x + gate, write out
    )

    out2d = pl.pallas_call(
        _gated_gelu_kernel,
        out_shape=jax.ShapeDtypeStruct((rows, h), x.dtype),
        grid_spec=pltpu.PrefetchScalarGridSpec(
            num_scalar_prefetch=0,
            grid=grid,
            in_specs=in_specs,
            out_specs=out_spec,
        ),
        compiler_params=pltpu.CompilerParams(
            dimension_semantics=("parallel", "parallel"),
            vmem_limit_bytes=40 * 1024 * 1024,
        ),
        cost_estimate=cost,
    )(*args)

    return out2d.reshape(*orig_shape[:-1], h)


def _reference(x):
    half = x.shape[-1] // 2
    xh, gate = x[..., :half], x[..., half:]
    act = 0.5 * gate * (1.0 + jnp.tanh(_GELU_C * (gate + 0.044715 * gate**3)))
    return xh * act


if __name__ == "__main__":
    key = jax.random.PRNGKey(0)

    # Small shape matching the module's forward (batch=2, seq=8, hidden=64).
    # Exercises the fallback (narrow, non-128-aligned half) path.
    x_small = jax.random.normal(key, (2, 8, 64), dtype=jnp.float32)
    out_small = jax.block_until_ready(vampnet_gated_gelu(x_small))
    ref_small = _reference(x_small)
    assert out_small.shape == (2, 8, 32), out_small.shape
    assert jnp.allclose(out_small, ref_small, atol=1e-5, rtol=1e-5), float(
        jnp.max(jnp.abs(out_small - ref_small))
    )

    # Small lane-aligned shape (hidden=256 -> half=128) exercising the
    # zero-copy split-input path used for realistic transformer widths.
    key2 = jax.random.PRNGKey(0)
    x_aligned = jax.random.normal(key2, (2, 8, 256), dtype=jnp.float32)
    out_aligned = jax.block_until_ready(vampnet_gated_gelu(x_aligned))
    ref_aligned = _reference(x_aligned)
    assert out_aligned.shape == (2, 8, 128), out_aligned.shape
    assert jnp.allclose(out_aligned, ref_aligned, atol=1e-5, rtol=1e-5), float(
        jnp.max(jnp.abs(out_aligned - ref_aligned))
    )

    print("KERNEL_OK")
</pallas_src>

<mosaic_0001>
module attributes {stable_mosaic.version = 11 : i64} {
  func.func @_gated_gelu_kernel(%arg0: i32, %arg1: i32, %arg2: memref<16x32xf32, #tpu.memory_space<vmem>>, %arg3: memref<16x32xf32, #tpu.memory_space<vmem>>, %arg4: memref<16x32xf32, #tpu.memory_space<vmem>>) attributes {dimension_semantics = [#tpu.dimension_semantics<parallel>, #tpu.dimension_semantics<parallel>], iteration_bounds = array<i64: 1, 1>, scalar_prefetch = 0 : i64, scratch_operands = 0 : i64, tpu.core_type = #tpu.core_type<tc>, window_params = [{transform_indices = @transform_0, window_bounds = array<i64: 16, 32>}, {transform_indices = @transform_1, window_bounds = array<i64: 16, 32>}, {transform_indices = @transform_2, window_bounds = array<i64: 16, 32>}]} {
    %c0 = arith.constant 0 : index
    %c0_0 = arith.constant 0 : index
    %0 = vector.load %arg2[%c0, %c0_0] : memref<16x32xf32, #tpu.memory_space<vmem>>, vector<16x32xf32>
    %c0_1 = arith.constant 0 : index
    %c0_2 = arith.constant 0 : index
    %1 = vector.load %arg3[%c0_1, %c0_2] : memref<16x32xf32, #tpu.memory_space<vmem>>, vector<16x32xf32>
    %cst = arith.constant 5.000000e-01 : f32
    %2 = vector.broadcast %cst : f32 to vector<16x32xf32>
    %3 = arith.mulf %2, %1 : vector<16x32xf32>
    %cst_3 = arith.constant 4.471500e-02 : f32
    %4 = vector.broadcast %cst_3 : f32 to vector<16x32xf32>
    %5 = arith.mulf %4, %1 : vector<16x32xf32>
    %6 = arith.mulf %5, %1 : vector<16x32xf32>
    %7 = arith.mulf %6, %1 : vector<16x32xf32>
    %8 = arith.addf %1, %7 : vector<16x32xf32>
    %cst_4 = arith.constant 0.797884583 : f32
    %9 = vector.broadcast %cst_4 : f32 to vector<16x32xf32>
    %10 = arith.mulf %9, %8 : vector<16x32xf32>
    %11 = math.tanh %10 : vector<16x32xf32>
    %cst_5 = arith.constant 1.000000e+00 : f32
    %12 = vector.broadcast %cst_5 : f32 to vector<16x32xf32>
    %13 = arith.addf %12, %11 : vector<16x32xf32>
    %14 = arith.mulf %3, %13 : vector<16x32xf32>
    %15 = arith.mulf %0, %14 : vector<16x32xf32>
    %c0_6 = arith.constant 0 : index
    %c0_7 = arith.constant 0 : index
    %16 = vector.load %arg4[%c0_6, %c0_7] : memref<16x32xf32, #tpu.memory_space<vmem>>, vector<16x32xf32>
    tpu.vector_store %arg4[%c0_6, %c0_7], %15 {strides = array<i32>} : memref<16x32xf32, #tpu.memory_space<vmem>>, vector<16x32xf32>,
    return
  }
  func.func @transform_0(%arg0: i32, %arg1: i32) -> (i32, i32) {
    %c0_i32 = arith.constant 0 : i32
    return %arg0, %arg1 : i32, i32
  }
  func.func @transform_1(%arg0: i32, %arg1: i32) -> (i32, i32) {
    %c0_i32 = arith.constant 0 : i32
    return %arg0, %arg1 : i32, i32
  }
  func.func @transform_2(%arg0: i32, %arg1: i32) -> (i32, i32) {
    %c0_i32 = arith.constant 0 : i32
    return %arg0, %arg1 : i32, i32
  }
}

</mosaic_0001>

<llo_original>
// kernel: tpu_custom_call.1
$region0: #{tpu_custom_call.1}
  #allocation0 [shape = 'u32[]', space=smem, size = 0x4, offset = 0x4, fixed_abs, tag = 'smem constant byte address 0x4 - core index']
  #allocation1 [shape = 'u32[144,128]{1,0:T(1,128)}', space=vmem, size = 0x12000, scoped, tag = 'internal scratch']
  %s0 = inlined_call_operand.hbm [shape: f32[16,32], index: 0, kind: input, shape index: {}]
  %s1 = inlined_call_operand.hbm [shape: f32[16,32], index: 1, kind: input, shape index: {}]
  %s2 = inlined_call_operand.hbm [shape: f32[16,32], index: 2, kind: output, shape index: {}]
  %s3 = sld [smem:[#allocation0]]
  $region26: #{tpu_custom_call.1} parent=0
    _
  %s5 = ssub.s32 1, %s3
  %s6 = scalar_select 0, %s5, %s3
  $region1: #{tpu_custom_call.1} parent=0
    #allocation2 [shape = 'u8[8192]{0}', space=vmem, size = 0x2000, scoped, tag = 'input window, operand 0, single buffered']
    #allocation3 [shape = 's32[1]{0}', space=sflag, size = 0x4, scoped, tag = 'scoped memory for tpu_custom_call.1']
    #allocation4 [shape = 's32[1]{0}', space=sflag, size = 0x4, scoped, tag = 'scoped memory for tpu_custom_call.1']
    #allocation5 [shape = 'u8[8192]{0}', space=vmem, size = 0x2000, scoped, tag = 'input window, operand 1, single buffered']
    #allocation6 [shape = 's32[1]{0}', space=sflag, size = 0x4, scoped, tag = 'scoped memory for tpu_custom_call.1']
    #allocation7 [shape = 'u8[8192]{0}', space=vmem, size = 0x2000, scoped, tag = 'output window, operand 0, single buffered']
    %7 = vsyncpa [#allocation3], 0
    %8 = vsyncpa [#allocation6], 0
    %9 = vsyncpa [#allocation4], 0
    // Predicated region
    $region2: #{tpu_custom_call.1} parent=1 // pred_check
      _
    $region3: #{tpu_custom_call.1} parent=1 // pred_check_branch
      %11 = sbr.rel (0) target = $region5
    $region4: #{tpu_custom_call.1} parent=1 // pred_region
      %s13 = ssub.s32 256, 256
      %14 = vsyncadd [#allocation3], %s13
      %s15 = sshll.u32 [#allocation2], 4
      %s16 = int_to_ptr.vmem [resolvable:$true] %s15
      %21 = dma.hbm_to_vmem [thread:$0]  %s0, 256, %s16, [#allocation3], 128, 128, 8
    $region5: #{tpu_custom_call.1} parent=1 // pred_fallthru
      _
    // Predicated region
    $region6: #{tpu_custom_call.1} parent=1 // pred_check
      _
    $region7: #{tpu_custom_call.1} parent=1 // pred_check_branch
      %23 = sbr.rel (0) target = $region9
    $region8: #{tpu_custom_call.1} parent=1 // pred_region
      %s25 = ssub.s32 256, 256
      %26 = vsyncadd [#allocation6], %s25
      %s27 = sshll.u32 [#allocation5], 4
      %s28 = int_to_ptr.vmem [resolvable:$true] %s27
      %33 = dma.hbm_to_vmem [thread:$0]  %s1, 256, %s28, [#allocation6], 128, 128, 8
    $region9: #{tpu_custom_call.1} parent=1 // pred_fallthru
      _
    // Predicated region
    $region10: #{tpu_custom_call.1} parent=1 // pred_check
      _
    $region11: #{tpu_custom_call.1} parent=1 // pred_check_branch
      %35 = sbr.rel (0) target = $region13
    $region12: #{tpu_custom_call.1} parent=1 // pred_region
      %36 = dma.done [#allocation3], 256
    $region13: #{tpu_custom_call.1} parent=1 // pred_fallthru
      _
    // Predicated region
    $region14: #{tpu_custom_call.1} parent=1 // pred_check
      _
    $region15: #{tpu_custom_call.1} parent=1 // pred_check_branch
      %38 = sbr.rel (0) target = $region17
    $region16: #{tpu_custom_call.1} parent=1 // pred_region
      %39 = dma.done [#allocation6], 256
    $region17: #{tpu_custom_call.1} parent=1 // pred_fallthru
      _
    %v40 = vld [vmem:[#allocation2] sm:$0xff]
    %v41 = vld [vmem:[#allocation2 + $0x8] sm:$0xff]
    %v42 = vld [vmem:[#allocation5] sm:$0xff]
    %v43 = vld [vmem:[#allocation5 + $0x8] sm:$0xff]
    %v44 = vmul.f32 %v42, 0.5
    %v45 = vmul.f32 %v43, 0.5
    %v46 = vmul.f32 %v42, 0.044715
    %v47 = vmul.f32 %v43, 0.044715
    %v48 = vmul.f32 %v46, %v42
    %v49 = vmul.f32 %v47, %v43
    %v50 = vmul.f32 %v48, %v42
    %v51 = vmul.f32 %v49, %v43
    %v52 = vadd.f32 %v42, %v50
    %v53 = vadd.f32 %v43, %v51
    %v54 = vmul.f32 %v52, 0.7978846
    %v55 = vmul.f32 %v53, 0.7978846
    %v56 = vtanh.pop %v54
    %v57 = vtanh.pop %v55
    %v58 = vadd.f32 %v56, 1.0
    %v59 = vadd.f32 %v57, 1.0
    %v60 = vmul.f32 %v44, %v58
    %v61 = vmul.f32 %v45, %v59
    %v62 = vmul.f32 %v40, %v60
    %v63 = vmul.f32 %v41, %v61
    %vm64 = vcmask 261120
    %65 = vst.msk [vmem:[#allocation7] sm:$0xff] %vm64, %v62
    %66 = vst.msk [vmem:[#allocation7 + $0x8] sm:$0xff] %vm64, %v63
    // Predicated region
    $region18: #{tpu_custom_call.1} parent=1 // pred_check
      _
    $region19: #{tpu_custom_call.1} parent=1 // pred_check_branch
      %68 = sbr.rel (0) target = $region21
    $region20: #{tpu_custom_call.1} parent=1 // pred_region
      %s70 = ssub.s32 256, 256
      %71 = vsyncadd [#allocation4], %s70
      %s72 = sshll.u32 [#allocation7], 4
      %s73 = int_to_ptr.vmem [resolvable:$true] %s72
      %78 = dma.vmem_to_hbm [thread:$0]  %s73, 256, %s2, [#allocation4], 128, 128, 8
    $region21: #{tpu_custom_call.1} parent=1 // pred_fallthru
      _
    // Predicated region
    $region22: #{tpu_custom_call.1} parent=1 // pred_check
      _
    $region23: #{tpu_custom_call.1} parent=1 // pred_check_branch
      %80 = sbr.rel (0) target = $region25
    $region24: #{tpu_custom_call.1} parent=1 // pred_region
      %81 = dma.done [#allocation4], 256
    $region25: #{tpu_custom_call.1} parent=1 // pred_fallthru
      _
    %82 = vsyncpa [#allocation3], 1
    %83 = vsyncpa [#allocation6], 1
    %84 = vsyncpa [#allocation4], 1

</llo_original>
